<compile_context>
chip_gen: v6e
topology: v6e:2x2x1
jax: 0.10.0
libtpu: 0.0.40
codegen_flags: <defaults>
</compile_context>

<pallas_src>
import jax
import jax.numpy as jnp
from jax.experimental import pallas as pl
from jax.experimental.pallas import tpu as pltpu


# Scoped VMEM budget: per-step working sets here are a few MiB, so 32 MiB leaves
# ample headroom and is safe on v5e/v6e (128 MiB physical) and v7x (64 MiB).
_VMEM_LIMIT_BYTES = 32 * 1024 * 1024
_FUSED_MAX_NPAD = 256          # below this everything fits one VMEM-resident kernel


def _round_up(v, m):
    return (v + m - 1) // m * m


def _pad2(a, rows, cols, dtype):
    a = a.astype(dtype)
    return jnp.pad(a, ((0, rows - a.shape[0]), (0, cols - a.shape[1])))


def _pick_tile(n_pad, candidates, min_tiles=1):
    for c in candidates:
        if n_pad % c == 0 and n_pad // c >= min_tiles:
            return c
    return candidates[-1]


# ------------------------------ graph glue --------------------------------- #
def build_graph(num_nodes, edge_index):
    """Integer counts of (A + remaining self loops) and deg^{-1/2} (gcn_norm)."""
    src, dst = edge_index[0], edge_index[1]
    # message src -> dst aggregated at target; duplicate edges accumulate
    counts = jnp.zeros((num_nodes, num_nodes), jnp.int32).at[dst, src].add(1)
    diag = jnp.diagonal(counts)
    counts = counts + jnp.diag(jnp.where(diag > 0, 0, 1).astype(jnp.int32))
    deg = jnp.sum(counts, axis=1).astype(jnp.float32)
    dis = jnp.where(deg > 0.0, jax.lax.rsqrt(jnp.maximum(deg, 1e-12)), 0.0)
    return counts, dis


# ----------------------------- Pallas kernels ------------------------------ #
def fused_small_kernel(adj_ref, dis_ref, x_ref, w1_ref, b1_ref, w2_ref, b2_ref,
                       out_ref):
    """Whole 2-layer GCN in one invocation (everything VMEM-resident).

    Â @ V == dis ⊙_rows (A @ (dis ⊙_rows V)); A stored as exact int8 counts.
    """
    dis = dis_ref[...]                                              # (n, 1) f32
    a = adj_ref[...].astype(jnp.float32).astype(jnp.bfloat16)       # exact counts
    xw1 = jnp.dot(x_ref[...], w1_ref[...], preferred_element_type=jnp.float32)
    xw1 = (xw1 * dis).astype(jnp.bfloat16)
    h = jnp.maximum(
        jnp.dot(a, xw1, preferred_element_type=jnp.float32) * dis + b1_ref[...],
        0.0)
    hw2 = (jnp.dot(h.astype(jnp.bfloat16), w2_ref[...],
                   preferred_element_type=jnp.float32) * dis).astype(jnp.bfloat16)
    out_ref[...] = (jnp.dot(a, hw2, preferred_element_type=jnp.float32) * dis
                    + b2_ref[...]).astype(out_ref.dtype)


def layer1_fused_kernel(adj_ref, di_ref, dk_ref, x_ref, w1_ref, b1_ref, w2_ref,
                        out_ref, acc_ref):
    """Layer-1 aggregation fused with the layer-2 feature transform.

    grid = (rows i, reduction k).  X is VMEM-resident (constant-index block);
    its k-slice and the XW1 tile are (re)computed per step (MXU slack hides it).
    out[i] = relu(dis_i * sum_k A[i,k] @ (dis_k * X[k] @ W1) + b1) @ W2
    """
    k = pl.program_id(1)

    @pl.when(k == 0)
    def _():
        acc_ref[...] = jnp.zeros_like(acc_ref)

    tk = adj_ref.shape[1]
    start = pl.multiple_of(k * tk, 256)
    x_k = x_ref[pl.ds(start, tk), :]                                # (tk, cin)
    xw1_k = jnp.dot(x_k, w1_ref[...], preferred_element_type=jnp.float32)
    xw1_k = (xw1_k * dk_ref[...]).astype(jnp.bfloat16)              # dis_k scaling
    a = adj_ref[...].astype(jnp.float32).astype(jnp.bfloat16)       # int8 -> bf16
    acc_ref[...] += jnp.dot(a, xw1_k, preferred_element_type=jnp.float32)

    @pl.when(k == pl.num_programs(1) - 1)
    def _():
        h = jnp.maximum(acc_ref[...] * di_ref[...] + b1_ref[...], 0.0)
        out_ref[...] = jnp.dot(h.astype(jnp.bfloat16), w2_ref[...],
                               preferred_element_type=jnp.float32
                               ).astype(out_ref.dtype)


def layer2_agg_kernel(adj_ref, di_ref, dk_ref, hw2_ref, b2_ref, out_ref, acc_ref):
    """Layer-2 aggregation: out[i] = dis_i * sum_k A[i,k] @ (dis_k * HW2[k]) + b2.

    HW2 is VMEM-resident (constant-index full-height block), sliced per k.
    """
    k = pl.program_id(1)

    @pl.when(k == 0)
    def _():
        acc_ref[...] = jnp.zeros_like(acc_ref)

    tk = adj_ref.shape[1]
    start = pl.multiple_of(k * tk, 256)
    v_k = (hw2_ref[pl.ds(start, tk), :].astype(jnp.float32)
           * dk_ref[...]).astype(jnp.bfloat16)
    a = adj_ref[...].astype(jnp.float32).astype(jnp.bfloat16)
    acc_ref[...] += jnp.dot(a, v_k, preferred_element_type=jnp.float32)

    @pl.when(k == pl.num_programs(1) - 1)
    def _():
        out_ref[...] = (acc_ref[...] * di_ref[...] + b2_ref[...]
                        ).astype(out_ref.dtype)


# ------------------------------- forward ----------------------------------- #
@jax.jit
def gnn_forward(x, edge_index, w1, b1, w2, b2):
    n, cin = x.shape
    hid = w1.shape[1]
    cout = w2.shape[1]

    counts, dis = build_graph(n, edge_index)

    # ---- pad to TPU-friendly (lane-dense) shapes ----
    n_pad = _round_up(n, 128)
    if n_pad > _FUSED_MAX_NPAD:
        n_pad = _round_up(n, 256)
    cin_p = _round_up(cin, 128)
    hid_p = _round_up(hid, 128)
    cout_p = _round_up(cout, 128)

    # exact int8 counts (duplicate-edge count capped at 127; normalisation is
    # applied in-kernel so the stored adjacency stays exactly representable)
    adj_i8 = _pad2(jnp.minimum(counts, 127), n_pad, n_pad, jnp.int8)
    dis_p = jnp.pad(dis, (0, n_pad - n)).reshape(n_pad, 1).astype(jnp.float32)
    x_p = _pad2(x, n_pad, cin_p, jnp.bfloat16)
    w1_p = _pad2(w1, cin_p, hid_p, jnp.bfloat16)
    b1_p = _pad2(b1, 1, hid_p, jnp.float32)
    w2_p = _pad2(w2, hid_p, cout_p, jnp.bfloat16)
    b2_p = _pad2(b2, 1, cout_p, jnp.float32)

    # -------- small-graph path: single fused VMEM-resident kernel --------
    if n_pad <= _FUSED_MAX_NPAD:
        flops_f = 2 * n_pad * (cin_p * hid_p + n_pad * hid_p
                               + hid_p * cout_p + n_pad * cout_p)
        bytes_f = (n_pad * n_pad + 2 * n_pad * cin_p + 2 * cin_p * hid_p
                   + 4 * hid_p + 2 * hid_p * cout_p + 4 * cout_p
                   + 4 * n_pad + 4 * n_pad * cout_p)
        out_p = pl.pallas_call(
            fused_small_kernel,
            out_shape=jax.ShapeDtypeStruct((n_pad, cout_p), jnp.float32),
            grid_spec=pltpu.PrefetchScalarGridSpec(
                num_scalar_prefetch=0,
                grid=(1,),
                in_specs=[
                    pl.BlockSpec((n_pad, n_pad), lambda i: (0, 0)),
                    pl.BlockSpec((n_pad, 1), lambda i: (0, 0)),
                    pl.BlockSpec((n_pad, cin_p), lambda i: (0, 0)),
                    pl.BlockSpec((cin_p, hid_p), lambda i: (0, 0)),
                    pl.BlockSpec((1, hid_p), lambda i: (0, 0)),
                    pl.BlockSpec((hid_p, cout_p), lambda i: (0, 0)),
                    pl.BlockSpec((1, cout_p), lambda i: (0, 0)),
                ],
                out_specs=pl.BlockSpec((n_pad, cout_p), lambda i: (0, 0)),
            ),
            compiler_params=pltpu.CompilerParams(
                dimension_semantics=("arbitrary",),
                vmem_limit_bytes=_VMEM_LIMIT_BYTES),
            cost_estimate=pl.CostEstimate(
                flops=flops_f, transcendentals=0, bytes_accessed=bytes_f),
        )(adj_i8, dis_p, x_p, w1_p, b1_p, w2_p, b2_p)
        return out_p[:n, :cout]

    # -------- tiled path: (rows, reduction) grid, large tiles --------
    tm = _pick_tile(n_pad, (512, 256, 128), min_tiles=2)   # >=2 row tiles (v7x)
    tk = _pick_tile(n_pad, (1024, 512, 256), min_tiles=1)
    n_rows = n_pad // tm
    n_k = n_pad // tk

    cp = pltpu.CompilerParams(
        dimension_semantics=("parallel", "arbitrary"),
        vmem_limit_bytes=_VMEM_LIMIT_BYTES)

    # ---- kernel B: HW2 = relu(Â @ (X @ W1) + b1) @ W2 ----
    flops_b = (2 * n_rows * n_pad * cin_p * hid_p      # recomputed XW1 per row tile
               + 2 * n_pad * n_pad * hid_p             # aggregation
               + 2 * n_pad * hid_p * cout_p)           # H @ W2
    bytes_b = (n_pad * n_pad                           # int8 adjacency counts
               + 2 * n_pad * cin_p                     # X (resident, loaded once)
               + 2 * cin_p * hid_p + 2 * hid_p * cout_p
               + 4 * hid_p + 8 * n_pad                 # b1 + dis (two views)
               + 2 * n_pad * cout_p)                   # HW2 out (bf16)
    hw2 = pl.pallas_call(
        layer1_fused_kernel,
        out_shape=jax.ShapeDtypeStruct((n_pad, cout_p), jnp.bfloat16),
        grid_spec=pltpu.PrefetchScalarGridSpec(
            num_scalar_prefetch=0,
            grid=(n_rows, n_k),
            in_specs=[
                pl.BlockSpec((tm, tk), lambda i, k: (i, k)),         # A counts
                pl.BlockSpec((tm, 1), lambda i, k: (i, 0)),          # dis rows
                pl.BlockSpec((tk, 1), lambda i, k: (k, 0)),          # dis k-slice
                pl.BlockSpec((n_pad, cin_p), lambda i, k: (0, 0)),   # X resident
                pl.BlockSpec((cin_p, hid_p), lambda i, k: (0, 0)),   # W1
                pl.BlockSpec((1, hid_p), lambda i, k: (0, 0)),       # b1
                pl.BlockSpec((hid_p, cout_p), lambda i, k: (0, 0)),  # W2
            ],
            out_specs=pl.BlockSpec((tm, cout_p), lambda i, k: (i, 0)),
            scratch_shapes=[pltpu.VMEM((tm, hid_p), jnp.float32)],
        ),
        compiler_params=cp,
        cost_estimate=pl.CostEstimate(
            flops=flops_b, transcendentals=0, bytes_accessed=bytes_b),
    )(adj_i8, dis_p, dis_p, x_p, w1_p, b1_p, w2_p)

    # ---- kernel C: OUT = Â @ HW2 + b2 ----
    flops_c = 2 * n_pad * n_pad * cout_p
    bytes_c = (n_pad * n_pad + 2 * n_pad * cout_p      # adjacency + resident HW2
               + 4 * cout_p + 8 * n_pad
               + 4 * n_pad * cout_p)                   # f32 out
    out_p = pl.pallas_call(
        layer2_agg_kernel,
        out_shape=jax.ShapeDtypeStruct((n_pad, cout_p), jnp.float32),
        grid_spec=pltpu.PrefetchScalarGridSpec(
            num_scalar_prefetch=0,
            grid=(n_rows, n_k),
            in_specs=[
                pl.BlockSpec((tm, tk), lambda i, k: (i, k)),         # A counts
                pl.BlockSpec((tm, 1), lambda i, k: (i, 0)),          # dis rows
                pl.BlockSpec((tk, 1), lambda i, k: (k, 0)),          # dis k-slice
                pl.BlockSpec((n_pad, cout_p), lambda i, k: (0, 0)),  # HW2 resident
                pl.BlockSpec((1, cout_p), lambda i, k: (0, 0)),      # b2
            ],
            out_specs=pl.BlockSpec((tm, cout_p), lambda i, k: (i, 0)),
            scratch_shapes=[pltpu.VMEM((tm, cout_p), jnp.float32)],
        ),
        compiler_params=cp,
        cost_estimate=pl.CostEstimate(
            flops=flops_c, transcendentals=0, bytes_accessed=bytes_c),
    )(adj_i8, dis_p, dis_p, hw2, b2_p)

    return out_p[:n, :cout]


# ------------------------------ reference ---------------------------------- #
def gnn_reference(x, edge_index, w1, b1, w2, b2):
    counts, dis = build_graph(x.shape[0], edge_index)
    adj = dis[:, None] * counts.astype(jnp.float32) * dis[None, :]
    h = jnp.maximum(adj @ (x @ w1) + b1, 0.0)
    return adj @ (h @ w2) + b2


# ---------------------------- parameter init -------------------------------- #
def glorot(key, shape):
    fan_in, fan_out = shape
    limit = jnp.sqrt(6.0 / (fan_in + fan_out))
    return jax.random.uniform(key, shape, jnp.float32, -limit, limit)


def init_params(key, in_channels, hidden_channels, out_channels):
    k1, k2 = jax.random.split(key)
    w1 = glorot(k1, (in_channels, hidden_channels))
    b1 = jnp.zeros((1, hidden_channels), jnp.float32)
    w2 = glorot(k2, (hidden_channels, out_channels))
    b2 = jnp.zeros((1, out_channels), jnp.float32)
    return w1, b1, w2, b2


# ----------------------------------- main ----------------------------------- #
def _run_case(key, num_nodes, in_c, hid_c, out_c, num_edges):
    kx, ke, kp = jax.random.split(key, 3)
    x = jax.random.normal(kx, (num_nodes, in_c), jnp.float32)
    edge_index = jax.random.randint(ke, (2, num_edges), 0, num_nodes, jnp.int32)
    w1, b1, w2, b2 = init_params(kp, in_c, hid_c, out_c)

    out = jax.block_until_ready(gnn_forward(x, edge_index, w1, b1, w2, b2))

    # self.embedding == forward output (get_embedding would return `out`)
    assert out.shape == (num_nodes, out_c)
    assert bool(jnp.all(jnp.isfinite(out)))

    ref = gnn_reference(x, edge_index, w1, b1, w2, b2)
    err = float(jnp.max(jnp.abs(out - ref)))
    scale = max(1.0, float(jnp.max(jnp.abs(ref))))
    assert err < 0.03 * scale, f"max abs err {err} vs scale {scale} too large"


if __name__ == "__main__":
    key = jax.random.PRNGKey(0)
    k1, k2 = jax.random.split(key)

    # small, module-consistent shapes (conv_model='GCN'; num_heads/dropout only
    # affect the GAT branches) -> single fused VMEM-resident kernel
    _run_case(k1, num_nodes=16, in_c=8, hid_c=32, out_c=16, num_edges=24)

    # slightly larger graph -> exercises the tiled (rows x reduction) kernels
    _run_case(k2, num_nodes=700, in_c=12, hid_c=64, out_c=20, num_edges=3500)

    print("KERNEL_OK")
</pallas_src>

<mosaic_0001>
module attributes {stable_mosaic.version = 11 : i64} {
  func.func private @main(%arg0: i32) attributes {dimension_semantics = [#tpu.dimension_semantics<core_parallel>], iteration_bounds = array<i64: 2>, tpu.core_type = #tpu.core_type<sc_scalar_subcore>, window_params = []} {
    return
  }
}

module attributes {stable_mosaic.version = 11 : i64} {
  func.func private @main(%arg0: i32) attributes {dimension_semantics = [#tpu.dimension_semantics<core_parallel>], iteration_bounds = array<i64: 2>, tpu.core_type = #tpu.core_type<sc_scalar_subcore>, window_params = []} {
    return
  }
}

module attributes {stable_mosaic.version = 11 : i64} {
  func.func @fused_small_kernel(%arg0: i32, %arg1: memref<128x128xi8, #tpu.memory_space<vmem>>, %arg2: memref<128x1xf32, #tpu.memory_space<vmem>>, %arg3: memref<128x128xbf16, #tpu.memory_space<vmem>>, %arg4: memref<128x128xbf16, #tpu.memory_space<vmem>>, %arg5: memref<1x128xf32, #tpu.memory_space<vmem>>, %arg6: memref<128x128xbf16, #tpu.memory_space<vmem>>, %arg7: memref<1x128xf32, #tpu.memory_space<vmem>>, %arg8: memref<128x128xf32, #tpu.memory_space<vmem>>) attributes {dimension_semantics = [#tpu.dimension_semantics<arbitrary>], iteration_bounds = array<i64: 1>, scalar_prefetch = 0 : i64, scratch_operands = 0 : i64, tpu.core_type = #tpu.core_type<tc>, window_params = [{pipeline_mode = #tpu.pipeline_mode<synchronous>, transform_indices = @transform_0, window_bounds = array<i64: 128, 128>}, {pipeline_mode = #tpu.pipeline_mode<synchronous>, transform_indices = @transform_1, window_bounds = array<i64: 128, 1>}, {pipeline_mode = #tpu.pipeline_mode<synchronous>, transform_indices = @transform_2, window_bounds = array<i64: 128, 128>}, {pipeline_mode = #tpu.pipeline_mode<synchronous>, transform_indices = @transform_3, window_bounds = array<i64: 128, 128>}, {pipeline_mode = #tpu.pipeline_mode<synchronous>, transform_indices = @transform_4, window_bounds = array<i64: 1, 128>}, {pipeline_mode = #tpu.pipeline_mode<synchronous>, transform_indices = @transform_5, window_bounds = array<i64: 128, 128>}, {pipeline_mode = #tpu.pipeline_mode<synchronous>, transform_indices = @transform_6, window_bounds = array<i64: 1, 128>}, {pipeline_mode = #tpu.pipeline_mode<synchronous>, transform_indices = @transform_7, window_bounds = array<i64: 128, 128>}]} {
    %c0 = arith.constant 0 : index
    %c0_0 = arith.constant 0 : index
    %0 = vector.load %arg2[%c0, %c0_0] : memref<128x1xf32, #tpu.memory_space<vmem>>, vector<128x1xf32>
    %c0_1 = arith.constant 0 : index
    %c0_2 = arith.constant 0 : index
    %1 = vector.load %arg1[%c0_1, %c0_2] : memref<128x128xi8, #tpu.memory_space<vmem>>, vector<128x128xi8>
    %2 = arith.sitofp %1 : vector<128x128xi8> to vector<128x128xf32>
    %3 = arith.truncf %2 : vector<128x128xf32> to vector<128x128xbf16>
    %c0_3 = arith.constant 0 : index
    %c0_4 = arith.constant 0 : index
    %4 = vector.load %arg3[%c0_3, %c0_4] : memref<128x128xbf16, #tpu.memory_space<vmem>>, vector<128x128xbf16>
    %c0_5 = arith.constant 0 : index
    %c0_6 = arith.constant 0 : index
    %5 = vector.load %arg4[%c0_5, %c0_6] : memref<128x128xbf16, #tpu.memory_space<vmem>>, vector<128x128xbf16>
    %cst = arith.constant dense<0.000000e+00> : vector<128x128xf32>
    %6 = tpu.matmul %4, %5, %cst {dimension_numbers = #tpu.dot_dimension_numbers<[1], [0], [0], [1], [0, 0, 1, 1], [], []>} : vector<128x128xbf16>, vector<128x128xbf16>, vector<128x128xf32> -> vector<128x128xf32>
    %7 = vector.broadcast %0 : vector<128x1xf32> to vector<128x128xf32>
    %8 = arith.mulf %6, %7 : vector<128x128xf32>
    %9 = arith.truncf %8 : vector<128x128xf32> to vector<128x128xbf16>
    %cst_7 = arith.constant dense<0.000000e+00> : vector<128x128xf32>
    %10 = tpu.matmul %3, %9, %cst_7 {dimension_numbers = #tpu.dot_dimension_numbers<[1], [0], [0], [1], [0, 0, 1, 1], [], []>} : vector<128x128xbf16>, vector<128x128xbf16>, vector<128x128xf32> -> vector<128x128xf32>
    %11 = vector.broadcast %0 : vector<128x1xf32> to vector<128x128xf32>
    %12 = arith.mulf %10, %11 : vector<128x128xf32>
    %c0_8 = arith.constant 0 : index
    %c0_9 = arith.constant 0 : index
    %13 = vector.load %arg5[%c0_8, %c0_9] : memref<1x128xf32, #tpu.memory_space<vmem>>, vector<1x128xf32>
    %14 = vector.broadcast %13 : vector<1x128xf32> to vector<128x128xf32>
    %15 = arith.addf %12, %14 : vector<128x128xf32>
    %cst_10 = arith.constant 0.000000e+00 : f32
    %16 = vector.broadcast %cst_10 : f32 to vector<128x128xf32>
    %17 = arith.maximumf %15, %16 : vector<128x128xf32>
    %18 = arith.truncf %17 : vector<128x128xf32> to vector<128x128xbf16>
    %c0_11 = arith.constant 0 : index
    %c0_12 = arith.constant 0 : index
    %19 = vector.load %arg6[%c0_11, %c0_12] : memref<128x128xbf16, #tpu.memory_space<vmem>>, vector<128x128xbf16>
    %cst_13 = arith.constant dense<0.000000e+00> : vector<128x128xf32>
    %20 = tpu.matmul %18, %19, %cst_13 {dimension_numbers = #tpu.dot_dimension_numbers<[1], [0], [0], [1], [0, 0, 1, 1], [], []>} : vector<128x128xbf16>, vector<128x128xbf16>, vector<128x128xf32> -> vector<128x128xf32>
    %21 = vector.broadcast %0 : vector<128x1xf32> to vector<128x128xf32>
    %22 = arith.mulf %20, %21 : vector<128x128xf32>
    %23 = arith.truncf %22 : vector<128x128xf32> to vector<128x128xbf16>
    %cst_14 = arith.constant dense<0.000000e+00> : vector<128x128xf32>
    %24 = tpu.matmul %3, %23, %cst_14 {dimension_numbers = #tpu.dot_dimension_numbers<[1], [0], [0], [1], [0, 0, 1, 1], [], []>} : vector<128x128xbf16>, vector<128x128xbf16>, vector<128x128xf32> -> vector<128x128xf32>
    %25 = vector.broadcast %0 : vector<128x1xf32> to vector<128x128xf32>
    %26 = arith.mulf %24, %25 : vector<128x128xf32>
    %c0_15 = arith.constant 0 : index
    %c0_16 = arith.constant 0 : index
    %27 = vector.load %arg7[%c0_15, %c0_16] : memref<1x128xf32, #tpu.memory_space<vmem>>, vector<1x128xf32>
    %28 = vector.broadcast %27 : vector<1x128xf32> to vector<128x128xf32>
    %29 = arith.addf %26, %28 : vector<128x128xf32>
    %c0_17 = arith.constant 0 : index
    %c0_18 = arith.constant 0 : index
    %30 = vector.load %arg8[%c0_17, %c0_18] : memref<128x128xf32, #tpu.memory_space<vmem>>, vector<128x128xf32>
    tpu.vector_store %arg8[%c0_17, %c0_18], %29 {strides = array<i32>} : memref<128x128xf32, #tpu.memory_space<vmem>>, vector<128x128xf32>,
    return
  }
  func.func @transform_0(%arg0: i32) -> (i32, i32) {
    %c0_i32 = arith.constant 0 : i32
    %c0_i32_0 = arith.constant 0 : i32
    %c0_i32_1 = arith.constant 0 : i32
    return %c0_i32, %c0_i32_0 : i32, i32
  }
  func.func @transform_1(%arg0: i32) -> (i32, i32) {
    %c0_i32 = arith.constant 0 : i32
    %c0_i32_0 = arith.constant 0 : i32
    %c0_i32_1 = arith.constant 0 : i32
    return %c0_i32, %c0_i32_0 : i32, i32
  }
  func.func @transform_2(%arg0: i32) -> (i32, i32) {
    %c0_i32 = arith.constant 0 : i32
    %c0_i32_0 = arith.constant 0 : i32
    %c0_i32_1 = arith.constant 0 : i32
    return %c0_i32, %c0_i32_0 : i32, i32
  }
  func.func @transform_3(%arg0: i32) -> (i32, i32) {
    %c0_i32 = arith.constant 0 : i32
    %c0_i32_0 = arith.constant 0 : i32
    %c0_i32_1 = arith.constant 0 : i32
    return %c0_i32, %c0_i32_0 : i32, i32
  }
  func.func @transform_4(%arg0: i32) -> (i32, i32) {
    %c0_i32 = arith.constant 0 : i32
    %c0_i32_0 = arith.constant 0 : i32
    %c0_i32_1 = arith.constant 0 : i32
    return %c0_i32, %c0_i32_0 : i32, i32
  }
  func.func @transform_5(%arg0: i32) -> (i32, i32) {
    %c0_i32 = arith.constant 0 : i32
    %c0_i32_0 = arith.constant 0 : i32
    %c0_i32_1 = arith.constant 0 : i32
    return %c0_i32, %c0_i32_0 : i32, i32
  }
  func.func @transform_6(%arg0: i32) -> (i32, i32) {
    %c0_i32 = arith.constant 0 : i32
    %c0_i32_0 = arith.constant 0 : i32
    %c0_i32_1 = arith.constant 0 : i32
    return %c0_i32, %c0_i32_0 : i32, i32
  }
  func.func @transform_7(%arg0: i32) -> (i32, i32) {
    %c0_i32 = arith.constant 0 : i32
    %c0_i32_0 = arith.constant 0 : i32
    %c0_i32_1 = arith.constant 0 : i32
    return %c0_i32, %c0_i32_0 : i32, i32
  }
}

</mosaic_0001>

<llo_original>
// kernel: gnn_forward.1
$region0: #{gnn_forward.1}
  #allocation0 [shape = 'u32[]', space=smem, size = 0x4, offset = 0x4, fixed_abs, tag = 'smem constant byte address 0x4 - core index']
  #allocation1 [shape = 'u32[144,128]{1,0:T(1,128)}', space=vmem, size = 0x12000, scoped, tag = 'internal scratch']
  %s0 = inlined_call_operand.vmem [shape: s8[128,128], index: 0, kind: input, shape index: {}]
  %s1 = inlined_call_operand.vmem [shape: f32[128,1], index: 1, kind: input, shape index: {}]
  %s2 = inlined_call_operand.vmem [shape: bf16[128,128], index: 2, kind: input, shape index: {}]
  %s3 = inlined_call_operand.vmem [shape: bf16[128,128], index: 3, kind: input, shape index: {}]
  %s4 = inlined_call_operand.vmem [shape: f32[1,128], index: 4, kind: input, shape index: {}]
  %s5 = inlined_call_operand.vmem [shape: bf16[128,128], index: 5, kind: input, shape index: {}]
  %s6 = inlined_call_operand.vmem [shape: f32[1,128], index: 6, kind: input, shape index: {}]
  %s7 = inlined_call_operand.vmem [shape: f32[128,128], index: 7, kind: output, shape index: {}]
  %s8 = sld [smem:[#allocation0]]
  $region38: #{gnn_forward.1} parent=0
    _
  %s10 = ssub.s32 1, %s8
  %s11 = scalar_select 0, %s10, %s8
  // Predicated region
  $region2: #{gnn_forward.1} parent=0 // pred_check
    _
  $region3: #{gnn_forward.1} parent=0 // pred_check_branch
    %13 = sbr.rel (0) target = $region5
  $region4: #{gnn_forward.1} parent=0 // pred_region
    _
  $region5: #{gnn_forward.1} parent=0 // pred_fallthru
    _
  // Predicated region
  $region6: #{gnn_forward.1} parent=0 // pred_check
    _
  $region7: #{gnn_forward.1} parent=0 // pred_check_branch
    %15 = sbr.rel (0) target = $region9
  $region8: #{gnn_forward.1} parent=0 // pred_region
    _
  $region9: #{gnn_forward.1} parent=0 // pred_fallthru
    _
  // Predicated region
  $region10: #{gnn_forward.1} parent=0 // pred_check
    _
  $region11: #{gnn_forward.1} parent=0 // pred_check_branch
    %17 = sbr.rel (0) target = $region13
  $region12: #{gnn_forward.1} parent=0 // pred_region
    _
  $region13: #{gnn_forward.1} parent=0 // pred_fallthru
    _
  // Predicated region
  $region14: #{gnn_forward.1} parent=0 // pred_check
    _
  $region15: #{gnn_forward.1} parent=0 // pred_check_branch
    %19 = sbr.rel (0) target = $region17
  $region16: #{gnn_forward.1} parent=0 // pred_region
    _
  $region17: #{gnn_forward.1} parent=0 // pred_fallthru
    _
  // Predicated region
  $region18: #{gnn_forward.1} parent=0 // pred_check
    _
  $region19: #{gnn_forward.1} parent=0 // pred_check_branch
    %21 = sbr.rel (0) target = $region21
  $region20: #{gnn_forward.1} parent=0 // pred_region
    _
  $region21: #{gnn_forward.1} parent=0 // pred_fallthru
    _
  // Predicated region
  $region22: #{gnn_forward.1} parent=0 // pred_check
    _
  $region23: #{gnn_forward.1} parent=0 // pred_check_branch
    %23 = sbr.rel (0) target = $region25
  $region24: #{gnn_forward.1} parent=0 // pred_region
    _
  $region25: #{gnn_forward.1} parent=0 // pred_fallthru
    _
  // Predicated region
  $region26: #{gnn_forward.1} parent=0 // pred_check
    _
  $region27: #{gnn_forward.1} parent=0 // pred_check_branch
    %25 = sbr.rel (0) target = $region29
  $region28: #{gnn_forward.1} parent=0 // pred_region
    _
  $region29: #{gnn_forward.1} parent=0 // pred_fallthru
    _
  %v27 = vld [vmem:[%s1] sm:$0xff]
  %v28 = vld [vmem:[%s1 + $0x8] sm:$0xff]
  %v29 = vld [vmem:[%s1 + $0x10] sm:$0xff]
  %v30 = vld [vmem:[%s1 + $0x18] sm:$0xff]
  %v31 = vld [vmem:[%s1 + $0x20] sm:$0xff]
  %v32 = vld [vmem:[%s1 + $0x28] sm:$0xff]
  %v33 = vld [vmem:[%s1 + $0x30] sm:$0xff]
  %v34 = vld [vmem:[%s1 + $0x38] sm:$0xff]
  %v35 = vld [vmem:[%s1 + $0x40] sm:$0xff]
  %v36 = vld [vmem:[%s1 + $0x48] sm:$0xff]
  %v37 = vld [vmem:[%s1 + $0x50] sm:$0xff]
  %v38 = vld [vmem:[%s1 + $0x58] sm:$0xff]
  %v39 = vld [vmem:[%s1 + $0x60] sm:$0xff]
  %v40 = vld [vmem:[%s1 + $0x68] sm:$0xff]
  %v41 = vld [vmem:[%s1 + $0x70] sm:$0xff]
  %v42 = vld [vmem:[%s1 + $0x78] sm:$0xff]
  %v43 = vld [vmem:[%s0] sm:$0xff]
  %v44 = vld [vmem:[%s0 + $0x8] sm:$0xff]
  %v45 = vld [vmem:[%s0 + $0x10] sm:$0xff]
  %v46 = vld [vmem:[%s0 + $0x18] sm:$0xff]
  %v47 = vunpack.c.l.s8.bf16 %v43
  %v48 = vunpack.c.h.s8.bf16 %v43
  %v49 = vunpack.c.l.s8.bf16 %v44
  %v50 = vunpack.c.h.s8.bf16 %v44
  %v51 = vunpack.c.l.s8.bf16 %v45
  %v52 = vunpack.c.h.s8.bf16 %v45
  %v53 = vunpack.c.l.s8.bf16 %v46
  %v54 = vunpack.c.h.s8.bf16 %v46
  %v55 = vld [vmem:[%s2] sm:$0xf]
  %v56 = vld [vmem:[%s2 + $0x4] sm:$0xf]
  %v57 = vld [vmem:[%s2 + $0x8] sm:$0xf]
  %v58 = vld [vmem:[%s2 + $0xc] sm:$0xf]
  %v59 = vld [vmem:[%s2 + $0x10] sm:$0xf]
  %v60 = vld [vmem:[%s2 + $0x14] sm:$0xf]
  %v61 = vld [vmem:[%s2 + $0x18] sm:$0xf]
  %v62 = vld [vmem:[%s2 + $0x1c] sm:$0xf]
  %v63 = vld [vmem:[%s2 + $0x20] sm:$0xf]
  %v64 = vld [vmem:[%s2 + $0x24] sm:$0xf]
  %v65 = vld [vmem:[%s2 + $0x28] sm:$0xf]
  %v66 = vld [vmem:[%s2 + $0x2c] sm:$0xf]
  %v67 = vld [vmem:[%s2 + $0x30] sm:$0xf]
  %v68 = vld [vmem:[%s2 + $0x34] sm:$0xf]
  %v69 = vld [vmem:[%s2 + $0x38] sm:$0xf]
  %v70 = vld [vmem:[%s2 + $0x3c] sm:$0xf]
  %v71 = vld [vmem:[%s3] sm:$0xf]
  %v72 = vld [vmem:[%s3 + $0x4] sm:$0xf]
  %v73 = vld [vmem:[%s3 + $0x8] sm:$0xf]
  %v74 = vld [vmem:[%s3 + $0xc] sm:$0xf]
  %v75 = vld [vmem:[%s3 + $0x10] sm:$0xf]
  %v76 = vld [vmem:[%s3 + $0x14] sm:$0xf]
  %v77 = vld [vmem:[%s3 + $0x18] sm:$0xf]
  %v78 = vld [vmem:[%s3 + $0x1c] sm:$0xf]
  %v79 = vld [vmem:[%s3 + $0x20] sm:$0xf]
  %v80 = vld [vmem:[%s3 + $0x24] sm:$0xf]
  %v81 = vld [vmem:[%s3 + $0x28] sm:$0xf]
  %v82 = vld [vmem:[%s3 + $0x2c] sm:$0xf]
  %v83 = vld [vmem:[%s3 + $0x30] sm:$0xf]
  %v84 = vld [vmem:[%s3 + $0x34] sm:$0xf]
  %v85 = vld [vmem:[%s3 + $0x38] sm:$0xf]
  %v86 = vld [vmem:[%s3 + $0x3c] sm:$0xf]
  %v103 = vunpack.c.l.b16 %v55
  %v104 = vunpack.c.l.b16 %v56
  %v105 = vunpack.c.l.b16 %v57
  %v106 = vunpack.c.l.b16 %v58
  %v107 = vunpack.c.l.b16 %v59
  %v108 = vunpack.c.l.b16 %v60
  %v109 = vunpack.c.l.b16 %v61
  %v110 = vunpack.c.l.b16 %v62
  %v111 = vunpack.c.l.b16 %v63
  %v112 = vunpack.c.l.b16 %v64
  %v113 = vunpack.c.l.b16 %v65
  %v114 = vunpack.c.l.b16 %v66
  %v115 = vunpack.c.l.b16 %v67
  %v116 = vunpack.c.l.b16 %v68
  %v117 = vunpack.c.l.b16 %v69
  %v118 = vunpack.c.l.b16 %v70
  %v119 = vpack.c.b16 %v104, %v103
  %v120 = vpack.c.b16 %v106, %v105
  %v121 = vpack.c.b16 %v108, %v107
  %v122 = vpack.c.b16 %v110, %v109
  %v123 = vpack.c.b16 %v112, %v111
  %v124 = vpack.c.b16 %v114, %v113
  %v125 = vpack.c.b16 %v116, %v115
  %v126 = vpack.c.b16 %v118, %v117
  %v151 = vunpack.c.l.b16 %v71
  %v152 = vunpack.c.l.b16 %v72
  %v153 = vunpack.c.l.b16 %v73
  %v154 = vunpack.c.l.b16 %v74
  %v155 = vunpack.c.l.b16 %v75
  %v156 = vunpack.c.l.b16 %v76
  %v157 = vunpack.c.l.b16 %v77
  %v158 = vunpack.c.l.b16 %v78
  %v159 = vunpack.c.l.b16 %v79
  %v160 = vunpack.c.l.b16 %v80
  %v161 = vunpack.c.l.b16 %v81
  %v162 = vunpack.c.l.b16 %v82
  %v163 = vunpack.c.l.b16 %v83
  %v164 = vunpack.c.l.b16 %v84
  %v165 = vunpack.c.l.b16 %v85
  %v166 = vunpack.c.l.b16 %v86
  %v167 = vpack.c.b16 %v152, %v151
  %v168 = vpack.c.b16 %v154, %v153
  %v169 = vpack.c.b16 %v156, %v155
  %v170 = vpack.c.b16 %v158, %v157
  %v171 = vpack.c.b16 %v160, %v159
  %v172 = vpack.c.b16 %v162, %v161
  %v173 = vpack.c.b16 %v164, %v163
  %v174 = vpack.c.b16 %v166, %v165
  %183 = vmatprep.subr.bf16.mxu0 0
  %184 = vmatpush1.bf16.msra.mxu0 %v174
  %185 = vmatprep.subr.bf16.mxu0 0
  %186 = vmatpush1.bf16.msra.mxu0 %v173
  %187 = vmatprep.subr.bf16.mxu0 0
  %188 = vmatpush1.bf16.msra.mxu0 %v172
  %189 = vmatprep.subr.bf16.mxu0 0
  %190 = vmatpush1.bf16.msra.mxu0 %v171
  %191 = vmatprep.subr.bf16.mxu0 0
  %192 = vmatpush1.bf16.msra.mxu0 %v170
  %193 = vmatprep.subr.bf16.mxu0 0
  %194 = vmatpush1.bf16.msra.mxu0 %v169
  %195 = vmatprep.subr.bf16.mxu0 0
  %196 = vmatpush1.bf16.msra.mxu0 %v168
  %197 = vmatprep.subr.bf16.mxu0 0
  %198 = vmatpush1.bf16.msra.mxu0 %v167
  %199 = vmatprep.subr.bf16.mxu0 0
  %200 = vmatpush2.bf16.msra.mxu0 0
  %201 = vmatprep.subr.bf16.mxu0 0
  %202 = vmatpush2.bf16.msra.mxu0 0
  %203 = vmatprep.subr.bf16.mxu0 0
  %204 = vmatpush2.bf16.msra.mxu0 0
  %205 = vmatprep.subr.bf16.mxu0 0
  %206 = vmatpush2.bf16.msra.mxu0 0
  %207 = vmatprep.subr.bf16.mxu0 0
  %208 = vmatpush2.bf16.msra.mxu0 0
  %209 = vmatprep.subr.bf16.mxu0 0
  %210 = vmatpush2.bf16.msra.mxu0 0
  %211 = vmatprep.subr.bf16.mxu0 0
  %212 = vmatpush2.bf16.msra.mxu0 0
  %213 = vmatprep.subr.bf16.mxu0 0
  %214 = vmatpush2.bf16.msra.mxu0 0
  %215 = vmatprep.mubr.bf16.mxu0 0
  %216 = vmatmul.mubr.bf16.gmra.mxu0 %v119
  %v217 = vpop.f32.mrf.mxu0
  %v218 = vadd.f32 0.0, %v217
  %v219 = vpop.f32.mrf.mxu0
  %v220 = vpop.f32.mrf.mxu0
  %v221 = vadd.f32 0.0, %v220
  %v222 = vpop.f32.mrf.mxu0
  %223 = vmatprep.mubr.bf16.mxu0 0
  %224 = vmatmul.mubr.bf16.gmra.mxu0 %v120
  %v225 = vpop.f32.mrf.mxu0
  %v226 = vadd.f32 0.0, %v225
  %v227 = vpop.f32.mrf.mxu0
  %v228 = vpop.f32.mrf.mxu0
  %v229 = vadd.f32 0.0, %v228
  %v230 = vpop.f32.mrf.mxu0
  %231 = vmatprep.mubr.bf16.mxu0 0
  %232 = vmatmul.mubr.bf16.gmra.mxu0 %v121
  %v233 = vpop.f32.mrf.mxu0
  %v234 = vadd.f32 0.0, %v233
  %v235 = vpop.f32.mrf.mxu0
  %v236 = vpop.f32.mrf.mxu0
  %v237 = vadd.f32 0.0, %v236
  %v238 = vpop.f32.mrf.mxu0
  %239 = vmatprep.mubr.bf16.mxu0 0
  %240 = vmatmul.mubr.bf16.gmra.mxu0 %v122
  %v241 = vpop.f32.mrf.mxu0
  %v242 = vadd.f32 0.0, %v241
  %v243 = vpop.f32.mrf.mxu0
  %v244 = vpop.f32.mrf.mxu0
  %v245 = vadd.f32 0.0, %v244
  %v246 = vpop.f32.mrf.mxu0
  %247 = vmatprep.mubr.bf16.mxu0 0
  %248 = vmatmul.mubr.bf16.gmra.mxu0 %v123
  %v249 = vpop.f32.mrf.mxu0
  %v250 = vadd.f32 0.0, %v249
  %v251 = vpop.f32.mrf.mxu0
  %v252 = vpop.f32.mrf.mxu0
  %v253 = vadd.f32 0.0, %v252
  %v254 = vpop.f32.mrf.mxu0
  %255 = vmatprep.mubr.bf16.mxu0 0
  %256 = vmatmul.mubr.bf16.gmra.mxu0 %v124
  %v257 = vpop.f32.mrf.mxu0
  %v258 = vadd.f32 0.0, %v257
  %v259 = vpop.f32.mrf.mxu0
  %v260 = vpop.f32.mrf.mxu0
  %v261 = vadd.f32 0.0, %v260
  %v262 = vpop.f32.mrf.mxu0
  %263 = vmatprep.mubr.bf16.mxu0 0
  %264 = vmatmul.mubr.bf16.gmra.mxu0 %v125
  %v265 = vpop.f32.mrf.mxu0
  %v266 = vadd.f32 0.0, %v265
  %v267 = vpop.f32.mrf.mxu0
  %v268 = vpop.f32.mrf.mxu0
  %v269 = vadd.f32 0.0, %v268
  %v270 = vpop.f32.mrf.mxu0
  %271 = vmatprep.mubr.bf16.mxu0 0
  %272 = vmatmul.mubr.bf16.gmra.mxu0 %v126
  %v273 = vpop.f32.mrf.mxu0
  %v274 = vadd.f32 0.0, %v273
  %v275 = vpop.f32.mrf.mxu0
  %v276 = vpop.f32.mrf.mxu0
  %v277 = vadd.f32 0.0, %v276
  %v278 = vpop.f32.mrf.mxu0
  %279 = vdwg.mxu0
  %281 = vset.pattern.permute.xlu0 0
  %282 = vperm.xlu0 %281, %v27
  %v283 = vpop.permute.xlu0 %282
  %286 = vset.pattern.permute.xlu0 0
  %287 = vperm.xlu0 %286, %v28
  %v288 = vpop.permute.xlu0 %287
  %291 = vset.pattern.permute.xlu0 0
  %292 = vperm.xlu0 %291, %v29
  %v293 = vpop.permute.xlu0 %292
  %296 = vset.pattern.permute.xlu0 0
  %297 = vperm.xlu0 %296, %v30
  %v298 = vpop.permute.xlu0 %297
  %301 = vset.pattern.permute.xlu0 0
  %302 = vperm.xlu0 %301, %v31
  %v303 = vpop.permute.xlu0 %302
  %306 = vset.pattern.permute.xlu0 0
  %307 = vperm.xlu0 %306, %v32
  %v308 = vpop.permute.xlu0 %307
  %311 = vset.pattern.permute.xlu0 0
  %312 = vperm.xlu0 %311, %v33
  %v313 = vpop.permute.xlu0 %312
  %316 = vset.pattern.permute.xlu0 0
  %317 = vperm.xlu0 %316, %v34
  %v318 = vpop.permute.xlu0 %317
  %321 = vset.pattern.permute.xlu0 0
  %322 = vperm.xlu0 %321, %v35
  %v323 = vpop.permute.xlu0 %322
  %326 = vset.pattern.permute.xlu0 0
  %327 = vperm.xlu0 %326, %v36
  %v328 = vpop.permute.xlu0 %327
  %331 = vset.pattern.permute.xlu0 0
  %332 = vperm.xlu0 %331, %v37
  %v333 = vpop.permute.xlu0 %332
  %336 = vset.pattern.permute.xlu0 0
  %337 = vperm.xlu0 %336, %v38
  %v338 = vpop.permute.xlu0 %337
  %341 = vset.pattern.permute.xlu0 0
  %342 = vperm.xlu0 %341, %v39
  %v343 = vpop.permute.xlu0 %342
  %346 = vset.pattern.permute.xlu0 0
  %347 = vperm.xlu0 %346, %v40
  %v348 = vpop.permute.xlu0 %347
  %351 = vset.pattern.permute.xlu0 0
  %352 = vperm.xlu0 %351, %v41
  %v353 = vpop.permute.xlu0 %352
  %356 = vset.pattern.permute.xlu0 0
  %357 = vperm.xlu0 %356, %v42
  %v358 = vpop.permute.xlu0 %357
  %v360 = vmul.f32 %v218, %v283
  %v361 = vmul.f32 %v221, %v288
  %v362 = vmul.f32 %v226, %v293
  %v363 = vmul.f32 %v229, %v298
  %v364 = vmul.f32 %v234, %v303
  %v365 = vmul.f32 %v237, %v308
  %v366 = vmul.f32 %v242, %v313
  %v367 = vmul.f32 %v245, %v318
  %v368 = vmul.f32 %v250, %v323
  %v369 = vmul.f32 %v253, %v328
  %v370 = vmul.f32 %v258, %v333
  %v371 = vmul.f32 %v261, %v338
  %v372 = vmul.f32 %v266, %v343
  %v373 = vmul.f32 %v269, %v348
  %v374 = vmul.f32 %v274, %v353
  %v375 = vmul.f32 %v277, %v358
  %v376 = vpack.c.bf16 %v361, %v360
  %v377 = vpack.c.bf16 %v363, %v362
  %v378 = vpack.c.bf16 %v365, %v364
  %v379 = vpack.c.bf16 %v367, %v366
  %v380 = vpack.c.bf16 %v369, %v368
  %v381 = vpack.c.bf16 %v371, %v370
  %v382 = vpack.c.bf16 %v373, %v372
  %v383 = vpack.c.bf16 %v375, %v374
  %384 = vmatprep.subr.bf16.mxu0 0
  %385 = vmatpush1.bf16.msra.mxu0 %v383
  %386 = vmatprep.subr.bf16.mxu0 0
  %387 = vmatpush1.bf16.msra.mxu0 %v382
  %388 = vmatprep.subr.bf16.mxu0 0
  %389 = vmatpush1.bf16.msra.mxu0 %v381
  %390 = vmatprep.subr.bf16.mxu0 0
  %391 = vmatpush1.bf16.msra.mxu0 %v380
  %392 = vmatprep.subr.bf16.mxu0 0
  %393 = vmatpush1.bf16.msra.mxu0 %v379
  %394 = vmatprep.subr.bf16.mxu0 0
  %395 = vmatpush1.bf16.msra.mxu0 %v378
  %396 = vmatprep.subr.bf16.mxu0 0
  %397 = vmatpush1.bf16.msra.mxu0 %v377
  %398 = vmatprep.subr.bf16.mxu0 0
  %399 = vmatpush1.bf16.msra.mxu0 %v376
  %400 = vmatprep.subr.bf16.mxu0 0
  %401 = vmatpush2.bf16.msra.mxu0 0
  %402 = vmatprep.subr.bf16.mxu0 0
  %403 = vmatpush2.bf16.msra.mxu0 0
  %404 = vmatprep.subr.bf16.mxu0 0
  %405 = vmatpush2.bf16.msra.mxu0 0
  %406 = vmatprep.subr.bf16.mxu0 0
  %407 = vmatpush2.bf16.msra.mxu0 0
  %408 = vmatprep.subr.bf16.mxu0 0
  %409 = vmatpush2.bf16.msra.mxu0 0
  %410 = vmatprep.subr.bf16.mxu0 0
  %411 = vmatpush2.bf16.msra.mxu0 0
  %412 = vmatprep.subr.bf16.mxu0 0
  %413 = vmatpush2.bf16.msra.mxu0 0
  %414 = vmatprep.subr.bf16.mxu0 0
  %415 = vmatpush2.bf16.msra.mxu0 0
  %416 = vmatprep.mubr.bf16.mxu0 0
  %417 = vmatmul.mubr.bf16.gmra.mxu0 %v47
  %v418 = vpop.f32.mrf.mxu0
  %v419 = vadd.f32 0.0, %v418
  %v420 = vpop.f32.mrf.mxu0
  %v421 = vpop.f32.mrf.mxu0
  %v422 = vadd.f32 0.0, %v421
  %v423 = vpop.f32.mrf.mxu0
  %424 = vmatprep.mubr.bf16.mxu0 0
  %425 = vmatmul.mubr.bf16.gmra.mxu0 %v48
  %v426 = vpop.f32.mrf.mxu0
  %v427 = vadd.f32 0.0, %v426
  %v428 = vpop.f32.mrf.mxu0
  %v429 = vpop.f32.mrf.mxu0
  %v430 = vadd.f32 0.0, %v429
  %v431 = vpop.f32.mrf.mxu0
  %432 = vmatprep.mubr.bf16.mxu0 0
  %433 = vmatmul.mubr.bf16.gmra.mxu0 %v49
  %v434 = vpop.f32.mrf.mxu0
  %v435 = vadd.f32 0.0, %v434
  %v436 = vpop.f32.mrf.mxu0
  %v437 = vpop.f32.mrf.mxu0
  %v438 = vadd.f32 0.0, %v437
  %v439 = vpop.f32.mrf.mxu0
  %440 = vmatprep.mubr.bf16.mxu0 0
  %441 = vmatmul.mubr.bf16.gmra.mxu0 %v50
  %v442 = vpop.f32.mrf.mxu0
  %v443 = vadd.f32 0.0, %v442
  %v444 = vpop.f32.mrf.mxu0
  %v445 = vpop.f32.mrf.mxu0
  %v446 = vadd.f32 0.0, %v445
  %v447 = vpop.f32.mrf.mxu0
  %448 = vmatprep.mubr.bf16.mxu0 0
  %449 = vmatmul.mubr.bf16.gmra.mxu0 %v51
  %v450 = vpop.f32.mrf.mxu0
  %v451 = vadd.f32 0.0, %v450
  %v452 = vpop.f32.mrf.mxu0
  %v453 = vpop.f32.mrf.mxu0
  %v454 = vadd.f32 0.0, %v453
  %v455 = vpop.f32.mrf.mxu0
  %456 = vmatprep.mubr.bf16.mxu0 0
  %457 = vmatmul.mubr.bf16.gmra.mxu0 %v52
  %v458 = vpop.f32.mrf.mxu0
  %v459 = vadd.f32 0.0, %v458
  %v460 = vpop.f32.mrf.mxu0
  %v461 = vpop.f32.mrf.mxu0
  %v462 = vadd.f32 0.0, %v461
  %v463 = vpop.f32.mrf.mxu0
  %464 = vmatprep.mubr.bf16.mxu0 0
  %465 = vmatmul.mubr.bf16.gmra.mxu0 %v53
  %v466 = vpop.f32.mrf.mxu0
  %v467 = vadd.f32 0.0, %v466
  %v468 = vpop.f32.mrf.mxu0
  %v469 = vpop.f32.mrf.mxu0
  %v470 = vadd.f32 0.0, %v469
  %v471 = vpop.f32.mrf.mxu0
  %472 = vmatprep.mubr.bf16.mxu0 0
  %473 = vmatmul.mubr.bf16.gmra.mxu0 %v54
  %v474 = vpop.f32.mrf.mxu0
  %v475 = vadd.f32 0.0, %v474
  %v476 = vpop.f32.mrf.mxu0
  %v477 = vpop.f32.mrf.mxu0
  %v478 = vadd.f32 0.0, %v477
  %v479 = vpop.f32.mrf.mxu0
  %480 = vdwg.mxu0
  %v481 = vmul.f32 %v419, %v283
  %v482 = vmul.f32 %v422, %v288
  %v483 = vmul.f32 %v427, %v293
  %v484 = vmul.f32 %v430, %v298
  %v485 = vmul.f32 %v435, %v303
  %v486 = vmul.f32 %v438, %v308
  %v487 = vmul.f32 %v443, %v313
  %v488 = vmul.f32 %v446, %v318
  %v489 = vmul.f32 %v451, %v323
  %v490 = vmul.f32 %v454, %v328
  %v491 = vmul.f32 %v459, %v333
  %v492 = vmul.f32 %v462, %v338
  %v493 = vmul.f32 %v467, %v343
  %v494 = vmul.f32 %v470, %v348
  %v495 = vmul.f32 %v475, %v353
  %v496 = vmul.f32 %v478, %v358
  %v497 = vld [vmem:[%s4] sm:$0x1]
  %v499 = vlaneseq
  %v500 = vshrl.u32 %v499, 7
  %v501 = vsub.s32 0, %v500
  %v502 = vrot.slane %v497, %v501
  %v504 = vadd.f32 %v481, %v502
  %v505 = vadd.f32 %v482, %v502
  %v506 = vadd.f32 %v483, %v502
  %v507 = vadd.f32 %v484, %v502
  %v508 = vadd.f32 %v485, %v502
  %v509 = vadd.f32 %v486, %v502
  %v510 = vadd.f32 %v487, %v502
  %v511 = vadd.f32 %v488, %v502
  %v512 = vadd.f32 %v489, %v502
  %v513 = vadd.f32 %v490, %v502
  %v514 = vadd.f32 %v491, %v502
  %v515 = vadd.f32 %v492, %v502
  %v516 = vadd.f32 %v493, %v502
  %v517 = vadd.f32 %v494, %v502
  %v518 = vadd.f32 %v495, %v502
  %v519 = vadd.f32 %v496, %v502
  %v520 = vmax.f32 %v504, 0.0
  %v521 = vmax.f32 %v505, 0.0
  %v522 = vmax.f32 %v506, 0.0
  %v523 = vmax.f32 %v507, 0.0
  %v524 = vmax.f32 %v508, 0.0
  %v525 = vmax.f32 %v509, 0.0
  %v526 = vmax.f32 %v510, 0.0
  %v527 = vmax.f32 %v511, 0.0
  %v528 = vmax.f32 %v512, 0.0
  %v529 = vmax.f32 %v513, 0.0
  %v530 = vmax.f32 %v514, 0.0
  %v531 = vmax.f32 %v515, 0.0
  %v532 = vmax.f32 %v516, 0.0
  %v533 = vmax.f32 %v517, 0.0
  %v534 = vmax.f32 %v518, 0.0
  %v535 = vmax.f32 %v519, 0.0
  %v536 = vpack.c.bf16 %v521, %v520
  %v537 = vpack.c.bf16 %v523, %v522
  %v538 = vpack.c.bf16 %v525, %v524
  %v539 = vpack.c.bf16 %v527, %v526
  %v540 = vpack.c.bf16 %v529, %v528
  %v541 = vpack.c.bf16 %v531, %v530
  %v542 = vpack.c.bf16 %v533, %v532
  %v543 = vpack.c.bf16 %v535, %v534
  %v544 = vld [vmem:[%s5] sm:$0xf]
  %v545 = vld [vmem:[%s5 + $0x4] sm:$0xf]
  %v546 = vld [vmem:[%s5 + $0x8] sm:$0xf]
  %v547 = vld [vmem:[%s5 + $0xc] sm:$0xf]
  %v548 = vld [vmem:[%s5 + $0x10] sm:$0xf]
  %v549 = vld [vmem:[%s5 + $0x14] sm:$0xf]
  %v550 = vld [vmem:[%s5 + $0x18] sm:$0xf]
  %v551 = vld [vmem:[%s5 + $0x1c] sm:$0xf]
  %v552 = vld [vmem:[%s5 + $0x20] sm:$0xf]
  %v553 = vld [vmem:[%s5 + $0x24] sm:$0xf]
  %v554 = vld [vmem:[%s5 + $0x28] sm:$0xf]
  %v555 = vld [vmem:[%s5 + $0x2c] sm:$0xf]
  %v556 = vld [vmem:[%s5 + $0x30] sm:$0xf]
  %v557 = vld [vmem:[%s5 + $0x34] sm:$0xf]
  %v558 = vld [vmem:[%s5 + $0x38] sm:$0xf]
  %v559 = vld [vmem:[%s5 + $0x3c] sm:$0xf]
  %v576 = vunpack.c.l.b16 %v544
  %v577 = vunpack.c.l.b16 %v545
  %v578 = vunpack.c.l.b16 %v546
  %v579 = vunpack.c.l.b16 %v547
  %v580 = vunpack.c.l.b16 %v548
  %v581 = vunpack.c.l.b16 %v549
  %v582 = vunpack.c.l.b16 %v550
  %v583 = vunpack.c.l.b16 %v551
  %v584 = vunpack.c.l.b16 %v552
  %v585 = vunpack.c.l.b16 %v553
  %v586 = vunpack.c.l.b16 %v554
  %v587 = vunpack.c.l.b16 %v555
  %v588 = vunpack.c.l.b16 %v556
  %v589 = vunpack.c.l.b16 %v557
  %v590 = vunpack.c.l.b16 %v558
  %v591 = vunpack.c.l.b16 %v559
  %v592 = vpack.c.b16 %v577, %v576
  %v593 = vpack.c.b16 %v579, %v578
  %v594 = vpack.c.b16 %v581, %v580
  %v595 = vpack.c.b16 %v583, %v582
  %v596 = vpack.c.b16 %v585, %v584
  %v597 = vpack.c.b16 %v587, %v586
  %v598 = vpack.c.b16 %v589, %v588
  %v599 = vpack.c.b16 %v591, %v590
  %608 = vmatprep.subr.bf16.mxu0 0
  %609 = vmatpush1.bf16.msra.mxu0 %v599
  %610 = vmatprep.subr.bf16.mxu0 0
  %611 = vmatpush1.bf16.msra.mxu0 %v598
  %612 = vmatprep.subr.bf16.mxu0 0
  %613 = vmatpush1.bf16.msra.mxu0 %v597
  %614 = vmatprep.subr.bf16.mxu0 0
  %615 = vmatpush1.bf16.msra.mxu0 %v596
  %616 = vmatprep.subr.bf16.mxu0 0
  %617 = vmatpush1.bf16.msra.mxu0 %v595
  %618 = vmatprep.subr.bf16.mxu0 0
  %619 = vmatpush1.bf16.msra.mxu0 %v594
  %620 = vmatprep.subr.bf16.mxu0 0
  %621 = vmatpush1.bf16.msra.mxu0 %v593
  %622 = vmatprep.subr.bf16.mxu0 0
  %623 = vmatpush1.bf16.msra.mxu0 %v592
  %624 = vmatprep.subr.bf16.mxu0 0
  %625 = vmatpush2.bf16.msra.mxu0 0
  %626 = vmatprep.subr.bf16.mxu0 0
  %627 = vmatpush2.bf16.msra.mxu0 0
  %628 = vmatprep.subr.bf16.mxu0 0
  %629 = vmatpush2.bf16.msra.mxu0 0
  %630 = vmatprep.subr.bf16.mxu0 0
  %631 = vmatpush2.bf16.msra.mxu0 0
  %632 = vmatprep.subr.bf16.mxu0 0
  %633 = vmatpush2.bf16.msra.mxu0 0
  %634 = vmatprep.subr.bf16.mxu0 0
  %635 = vmatpush2.bf16.msra.mxu0 0
  %636 = vmatprep.subr.bf16.mxu0 0
  %637 = vmatpush2.bf16.msra.mxu0 0
  %638 = vmatprep.subr.bf16.mxu0 0
  %639 = vmatpush2.bf16.msra.mxu0 0
  %640 = vmatprep.mubr.bf16.mxu0 0
  %641 = vmatmul.mubr.bf16.gmra.mxu0 %v536
  %v642 = vpop.f32.mrf.mxu0
  %v643 = vadd.f32 0.0, %v642
  %v644 = vpop.f32.mrf.mxu0
  %v645 = vpop.f32.mrf.mxu0
  %v646 = vadd.f32 0.0, %v645
  %v647 = vpop.f32.mrf.mxu0
  %648 = vmatprep.mubr.bf16.mxu0 0
  %649 = vmatmul.mubr.bf16.gmra.mxu0 %v537
  %v650 = vpop.f32.mrf.mxu0
  %v651 = vadd.f32 0.0, %v650
  %v652 = vpop.f32.mrf.mxu0
  %v653 = vpop.f32.mrf.mxu0
  %v654 = vadd.f32 0.0, %v653
  %v655 = vpop.f32.mrf.mxu0
  %656 = vmatprep.mubr.bf16.mxu0 0
  %657 = vmatmul.mubr.bf16.gmra.mxu0 %v538
  %v658 = vpop.f32.mrf.mxu0
  %v659 = vadd.f32 0.0, %v658
  %v660 = vpop.f32.mrf.mxu0
  %v661 = vpop.f32.mrf.mxu0
  %v662 = vadd.f32 0.0, %v661
  %v663 = vpop.f32.mrf.mxu0
  %664 = vmatprep.mubr.bf16.mxu0 0
  %665 = vmatmul.mubr.bf16.gmra.mxu0 %v539
  %v666 = vpop.f32.mrf.mxu0
  %v667 = vadd.f32 0.0, %v666
  %v668 = vpop.f32.mrf.mxu0
  %v669 = vpop.f32.mrf.mxu0
  %v670 = vadd.f32 0.0, %v669
  %v671 = vpop.f32.mrf.mxu0
  %672 = vmatprep.mubr.bf16.mxu0 0
  %673 = vmatmul.mubr.bf16.gmra.mxu0 %v540
  %v674 = vpop.f32.mrf.mxu0
  %v675 = vadd.f32 0.0, %v674
  %v676 = vpop.f32.mrf.mxu0
  %v677 = vpop.f32.mrf.mxu0
  %v678 = vadd.f32 0.0, %v677
  %v679 = vpop.f32.mrf.mxu0
  %680 = vmatprep.mubr.bf16.mxu0 0
  %681 = vmatmul.mubr.bf16.gmra.mxu0 %v541
  %v682 = vpop.f32.mrf.mxu0
  %v683 = vadd.f32 0.0, %v682
  %v684 = vpop.f32.mrf.mxu0
  %v685 = vpop.f32.mrf.mxu0
  %v686 = vadd.f32 0.0, %v685
  %v687 = vpop.f32.mrf.mxu0
  %688 = vmatprep.mubr.bf16.mxu0 0
  %689 = vmatmul.mubr.bf16.gmra.mxu0 %v542
  %v690 = vpop.f32.mrf.mxu0
  %v691 = vadd.f32 0.0, %v690
  %v692 = vpop.f32.mrf.mxu0
  %v693 = vpop.f32.mrf.mxu0
  %v694 = vadd.f32 0.0, %v693
  %v695 = vpop.f32.mrf.mxu0
  %696 = vmatprep.mubr.bf16.mxu0 0
  %697 = vmatmul.mubr.bf16.gmra.mxu0 %v543
  %v698 = vpop.f32.mrf.mxu0
  %v699 = vadd.f32 0.0, %v698
  %v700 = vpop.f32.mrf.mxu0
  %v701 = vpop.f32.mrf.mxu0
  %v702 = vadd.f32 0.0, %v701
  %v703 = vpop.f32.mrf.mxu0
  %704 = vdwg.mxu0
  %v705 = vmul.f32 %v643, %v283
  %v706 = vmul.f32 %v646, %v288
  %v707 = vmul.f32 %v651, %v293
  %v708 = vmul.f32 %v654, %v298
  %v709 = vmul.f32 %v659, %v303
  %v710 = vmul.f32 %v662, %v308
  %v711 = vmul.f32 %v667, %v313
  %v712 = vmul.f32 %v670, %v318
  %v713 = vmul.f32 %v675, %v323
  %v714 = vmul.f32 %v678, %v328
  %v715 = vmul.f32 %v683, %v333
  %v716 = vmul.f32 %v686, %v338
  %v717 = vmul.f32 %v691, %v343
  %v718 = vmul.f32 %v694, %v348
  %v719 = vmul.f32 %v699, %v353
  %v720 = vmul.f32 %v702, %v358
  %v721 = vpack.c.bf16 %v706, %v705
  %v722 = vpack.c.bf16 %v708, %v707
  %v723 = vpack.c.bf16 %v710, %v709
  %v724 = vpack.c.bf16 %v712, %v711
  %v725 = vpack.c.bf16 %v714, %v713
  %v726 = vpack.c.bf16 %v716, %v715
  %v727 = vpack.c.bf16 %v718, %v717
  %v728 = vpack.c.bf16 %v720, %v719
  %729 = vmatprep.subr.bf16.mxu0 0
  %730 = vmatpush1.bf16.msra.mxu0 %v728
  %731 = vmatprep.subr.bf16.mxu0 0
  %732 = vmatpush1.bf16.msra.mxu0 %v727
  %733 = vmatprep.subr.bf16.mxu0 0
  %734 = vmatpush1.bf16.msra.mxu0 %v726
  %735 = vmatprep.subr.bf16.mxu0 0
  %736 = vmatpush1.bf16.msra.mxu0 %v725
  %737 = vmatprep.subr.bf16.mxu0 0
  %738 = vmatpush1.bf16.msra.mxu0 %v724
  %739 = vmatprep.subr.bf16.mxu0 0
  %740 = vmatpush1.bf16.msra.mxu0 %v723
  %741 = vmatprep.subr.bf16.mxu0 0
  %742 = vmatpush1.bf16.msra.mxu0 %v722
  %743 = vmatprep.subr.bf16.mxu0 0
  %744 = vmatpush1.bf16.msra.mxu0 %v721
  %745 = vmatprep.subr.bf16.mxu0 0
  %746 = vmatpush2.bf16.msra.mxu0 0
  %747 = vmatprep.subr.bf16.mxu0 0
  %748 = vmatpush2.bf16.msra.mxu0 0
  %749 = vmatprep.subr.bf16.mxu0 0
  %750 = vmatpush2.bf16.msra.mxu0 0
  %751 = vmatprep.subr.bf16.mxu0 0
  %752 = vmatpush2.bf16.msra.mxu0 0
  %753 = vmatprep.subr.bf16.mxu0 0
  %754 = vmatpush2.bf16.msra.mxu0 0
  %755 = vmatprep.subr.bf16.mxu0 0
  %756 = vmatpush2.bf16.msra.mxu0 0
  %757 = vmatprep.subr.bf16.mxu0 0
  %758 = vmatpush2.bf16.msra.mxu0 0
  %759 = vmatprep.subr.bf16.mxu0 0
  %760 = vmatpush2.bf16.msra.mxu0 0
  %761 = vmatprep.mubr.bf16.mxu0 0
  %762 = vmatmul.mubr.bf16.gmra.mxu0 %v47
  %v763 = vpop.f32.mrf.mxu0
  %v764 = vadd.f32 0.0, %v763
  %v765 = vpop.f32.mrf.mxu0
  %v766 = vpop.f32.mrf.mxu0
  %v767 = vadd.f32 0.0, %v766
  %v768 = vpop.f32.mrf.mxu0
  %769 = vmatprep.mubr.bf16.mxu0 0
  %770 = vmatmul.mubr.bf16.gmra.mxu0 %v48
  %v771 = vpop.f32.mrf.mxu0
  %v772 = vadd.f32 0.0, %v771
  %v773 = vpop.f32.mrf.mxu0
  %v774 = vpop.f32.mrf.mxu0
  %v775 = vadd.f32 0.0, %v774
  %v776 = vpop.f32.mrf.mxu0
  %777 = vmatprep.mubr.bf16.mxu0 0
  %778 = vmatmul.mubr.bf16.gmra.mxu0 %v49
  %v779 = vpop.f32.mrf.mxu0
  %v780 = vadd.f32 0.0, %v779
  %v781 = vpop.f32.mrf.mxu0
  %v782 = vpop.f32.mrf.mxu0
  %v783 = vadd.f32 0.0, %v782
  %v784 = vpop.f32.mrf.mxu0
  %785 = vmatprep.mubr.bf16.mxu0 0
  %786 = vmatmul.mubr.bf16.gmra.mxu0 %v50
  %v787 = vpop.f32.mrf.mxu0
  %v788 = vadd.f32 0.0, %v787
  %v789 = vpop.f32.mrf.mxu0
  %v790 = vpop.f32.mrf.mxu0
  %v791 = vadd.f32 0.0, %v790
  %v792 = vpop.f32.mrf.mxu0
  %793 = vmatprep.mubr.bf16.mxu0 0
  %794 = vmatmul.mubr.bf16.gmra.mxu0 %v51
  %v795 = vpop.f32.mrf.mxu0
  %v796 = vadd.f32 0.0, %v795
  %v797 = vpop.f32.mrf.mxu0
  %v798 = vpop.f32.mrf.mxu0
  %v799 = vadd.f32 0.0, %v798
  %v800 = vpop.f32.mrf.mxu0
  %801 = vmatprep.mubr.bf16.mxu0 0
  %802 = vmatmul.mubr.bf16.gmra.mxu0 %v52
  %v803 = vpop.f32.mrf.mxu0
  %v804 = vadd.f32 0.0, %v803
  %v805 = vpop.f32.mrf.mxu0
  %v806 = vpop.f32.mrf.mxu0
  %v807 = vadd.f32 0.0, %v806
  %v808 = vpop.f32.mrf.mxu0
  %809 = vmatprep.mubr.bf16.mxu0 0
  %810 = vmatmul.mubr.bf16.gmra.mxu0 %v53
  %v811 = vpop.f32.mrf.mxu0
  %v812 = vadd.f32 0.0, %v811
  %v813 = vpop.f32.mrf.mxu0
  %v814 = vpop.f32.mrf.mxu0
  %v815 = vadd.f32 0.0, %v814
  %v816 = vpop.f32.mrf.mxu0
  %817 = vmatprep.mubr.bf16.mxu0 0
  %818 = vmatmul.mubr.bf16.gmra.mxu0 %v54
  %v819 = vpop.f32.mrf.mxu0
  %v820 = vadd.f32 0.0, %v819
  %v821 = vpop.f32.mrf.mxu0
  %v822 = vpop.f32.mrf.mxu0
  %v823 = vadd.f32 0.0, %v822
  %v824 = vpop.f32.mrf.mxu0
  %825 = vdwg.mxu0
  %v826 = vmul.f32 %v764, %v283
  %v827 = vmul.f32 %v767, %v288
  %v828 = vmul.f32 %v772, %v293
  %v829 = vmul.f32 %v775, %v298
  %v830 = vmul.f32 %v780, %v303
  %v831 = vmul.f32 %v783, %v308
  %v832 = vmul.f32 %v788, %v313
  %v833 = vmul.f32 %v791, %v318
  %v834 = vmul.f32 %v796, %v323
  %v835 = vmul.f32 %v799, %v328
  %v836 = vmul.f32 %v804, %v333
  %v837 = vmul.f32 %v807, %v338
  %v838 = vmul.f32 %v812, %v343
  %v839 = vmul.f32 %v815, %v348
  %v840 = vmul.f32 %v820, %v353
  %v841 = vmul.f32 %v823, %v358
  %v842 = vld [vmem:[%s6] sm:$0x1]
  %v844 = vlaneseq
  %v845 = vshrl.u32 %v844, 7
  %v846 = vsub.s32 0, %v845
  %v847 = vrot.slane %v842, %v846
  %v849 = vadd.f32 %v826, %v847
  %v850 = vadd.f32 %v827, %v847
  %v851 = vadd.f32 %v828, %v847
  %v852 = vadd.f32 %v829, %v847
  %v853 = vadd.f32 %v830, %v847
  %v854 = vadd.f32 %v831, %v847
  %v855 = vadd.f32 %v832, %v847
  %v856 = vadd.f32 %v833, %v847
  %v857 = vadd.f32 %v834, %v847
  %v858 = vadd.f32 %v835, %v847
  %v859 = vadd.f32 %v836, %v847
  %v860 = vadd.f32 %v837, %v847
  %v861 = vadd.f32 %v838, %v847
  %v862 = vadd.f32 %v839, %v847
  %v863 = vadd.f32 %v840, %v847
  %v864 = vadd.f32 %v841, %v847
  %865 = vst [vmem:[%s7] sm:$0xff] %v849
  %866 = vst [vmem:[%s7 + $0x8] sm:$0xff] %v850
  %867 = vst [vmem:[%s7 + $0x10] sm:$0xff] %v851
  %868 = vst [vmem:[%s7 + $0x18] sm:$0xff] %v852
  %869 = vst [vmem:[%s7 + $0x20] sm:$0xff] %v853
  %870 = vst [vmem:[%s7 + $0x28] sm:$0xff] %v854
  %871 = vst [vmem:[%s7 + $0x30] sm:$0xff] %v855
  %872 = vst [vmem:[%s7 + $0x38] sm:$0xff] %v856
  %873 = vst [vmem:[%s7 + $0x40] sm:$0xff] %v857
  %874 = vst [vmem:[%s7 + $0x48] sm:$0xff] %v858
  %875 = vst [vmem:[%s7 + $0x50] sm:$0xff] %v859
  %876 = vst [vmem:[%s7 + $0x58] sm:$0xff] %v860
  %877 = vst [vmem:[%s7 + $0x60] sm:$0xff] %v861
  %878 = vst [vmem:[%s7 + $0x68] sm:$0xff] %v862
  %879 = vst [vmem:[%s7 + $0x70] sm:$0xff] %v863
  %880 = vst [vmem:[%s7 + $0x78] sm:$0xff] %v864
  // Predicated region
  $region30: #{gnn_forward.1} parent=0 // pred_check
    _
  $region31: #{gnn_forward.1} parent=0 // pred_check_branch
    %882 = sbr.rel (0) target = $region33
  $region32: #{gnn_forward.1} parent=0 // pred_region
    _
  $region33: #{gnn_forward.1} parent=0 // pred_fallthru
    _
  // Predicated region
  $region34: #{gnn_forward.1} parent=0 // pred_check
    _
  $region35: #{gnn_forward.1} parent=0 // pred_check_branch
    %884 = sbr.rel (0) target = $region37
  $region36: #{gnn_forward.1} parent=0 // pred_region
    _
  $region37: #{gnn_forward.1} parent=0 // pred_fallthru
    _

</llo_original>
